<compile_context>
chip_gen: v7x
topology: tpu7x:2x2x1
jax: 0.10.0
libtpu: 0.0.40
codegen_flags: <defaults>
</compile_context>

<pallas_src>
import jax
import jax.numpy as jnp
from jax.experimental import pallas as pl
from jax.experimental.pallas import tpu as pltpu

# ---- Config (small synthetic sizes consistent with the module) ----
RECOG_INPUT_SIZE = 256   # Config.recog_input_size
LATENT_SIZE = 64         # Config.latent_size -> D_out = 2*64 = 128 (lane-aligned)
BATCH = 256              # small batch -> single block, grid=(1,)

_MAX_SINGLE_BLOCK_ROWS = 1024  # one block up to here; beyond, tile the batch


# --------------------------------------------------------------------------
# Kernels
# --------------------------------------------------------------------------
def _recog_kernel(x_ref, w_ref, b_ref, o_ref):
    # x: (TB, D_in) f32, w: (D_in, D_out) bf16, b: (1, D_out) f32 -> o: (TB, D_out) f32
    # bf16 cast of x happens here (not in the wrapper): free on the idle VALU
    # slot, avoids an extra HBM round trip of the activations.
    x_bf16 = x_ref[...].astype(jnp.bfloat16)
    y = jnp.dot(x_bf16, w_ref[...], preferred_element_type=jnp.float32)
    o_ref[...] = (y + b_ref[...]).astype(o_ref.dtype)


def _recog_fused_z_kernel(x_ref, w_ref, b_ref, eps_ref, o_ref, z_ref):
    # Same Linear as above, plus the CVAE reparameterization epilogue fused in:
    #   z = mu + eps * exp(0.5 * logvar)
    # exp() -> EUP slot, mul/add -> VALU slot; both idle in this DMA/dispatch-
    # bound kernel, so the epilogue is essentially free.
    x_bf16 = x_ref[...].astype(jnp.bfloat16)
    y = jnp.dot(x_bf16, w_ref[...], preferred_element_type=jnp.float32) + b_ref[...]
    o_ref[...] = y.astype(o_ref.dtype)

    latent = z_ref.shape[-1]
    mu = y[:, :latent]
    logvar = y[:, latent:]
    z_ref[...] = (mu + eps_ref[...] * jnp.exp(0.5 * logvar)).astype(z_ref.dtype)


# --------------------------------------------------------------------------
# Tiling / compiler-parameter helpers
# --------------------------------------------------------------------------
def _pick_batch_block(batch):
    # Per-grid-step overhead (~0.35 us) dominates this ~17 MFLOP kernel, so use
    # as few blocks as possible.  Single block for small/medium batches; for
    # large batches prefer the biggest divisor block <= 1024 rows so no tail
    # masking is needed and VMEM stays bounded on v7x.
    if batch <= _MAX_SINGLE_BLOCK_ROWS:
        return batch
    for tb in (1024, 512, 256, 128, 64, 32, 16, 8):
        if batch % tb == 0:
            return tb
    # Odd huge batch: one giant block; _compiler_params sets an explicit (but
    # capped) VMEM limit for this path.
    return batch


def _compiler_params(tb, d_in, d_out, extra_lanes=0):
    # Per-block f32 streams (x + out [+ eps + z]) are double-buffered by the
    # pipeline; weight (bf16) and bias are grid-invariant and tiny.
    per_block = tb * (d_in + d_out + 2 * extra_lanes) * 4
    fixed = d_in * d_out * 2 + d_out * 4
    need = 2 * per_block + fixed + (1 << 20)  # + slack
    # Clamp below v7x's 64 MiB physical VMEM (v5e/v6e have 128 MiB, so this is
    # conservative everywhere).
    vmem_limit = int(min(max(need, 16 << 20), 56 << 20))
    return pltpu.CompilerParams(
        # Batch blocks are independent; lets v7x shard a multi-block grid
        # across both TensorCores.  With grid=(1,) (the common small-batch
        # case) there is no split, so no per-core overhead is paid.
        dimension_semantics=("parallel",),
        vmem_limit_bytes=vmem_limit,
    )


# --------------------------------------------------------------------------
# Parameter prep + public entry points
# --------------------------------------------------------------------------
def prepare_params(weight_f32, bias_f32):
    """One-time parameter prep (module init, not per call).

    weight_f32: (D_in, D_out) float32  (== torch Linear weight.T)
    bias_f32:   (D_out,)      float32
    Returns (weight_bf16, bias2d_f32) ready for recognition_network().
    """
    # TODO(synk): if a sibling Linear shares `inputs` (e.g. the prior network's
    # mulogvar projection), concatenate its weight along D_out here so a single
    # kernel fills the full 2x256x256 MXU on v6e/v7x.
    return weight_f32.astype(jnp.bfloat16), bias_f32.reshape(1, -1)


@jax.jit
def recognition_network(inputs, weight_bf16, bias2d):
    """inputs: (B, D_in) f32; weight_bf16: (D_in, 2*latent) bf16; bias2d: (1, 2*latent) f32.

    Returns (recog_mu, recog_logvar), each (B, latent) float32 — exactly the
    PyTorch module's forward.
    """
    B, D_in = inputs.shape
    D_out = weight_bf16.shape[1]
    tb = _pick_batch_block(B)

    mulogvar = pl.pallas_call(
        _recog_kernel,
        out_shape=jax.ShapeDtypeStruct((B, D_out), jnp.float32),
        grid=(B // tb,),
        in_specs=[
            pl.BlockSpec((tb, D_in), lambda i: (i, 0)),     # batch-tiled x (f32)
            pl.BlockSpec((D_in, D_out), lambda i: (0, 0)),  # weight: VMEM-resident
            pl.BlockSpec((1, D_out), lambda i: (0, 0)),     # bias:   VMEM-resident
        ],
        out_specs=pl.BlockSpec((tb, D_out), lambda i: (i, 0)),
        compiler_params=_compiler_params(tb, D_in, D_out),
    )(inputs, weight_bf16, bias2d)

    # torch.chunk(recog_mulogvar, 2, dim=1) — zero-cost wrapper slices so the
    # kernel output stays one lane-dense 128-wide block.
    latent = D_out // 2
    return mulogvar[:, :latent], mulogvar[:, latent:]


@jax.jit
def recognition_network_with_z(inputs, weight_bf16, bias2d, eps):
    """Fused variant: also returns z = mu + eps * exp(0.5 * logvar).

    eps: (B, latent) float32 standard-normal noise (passed in so the result is
    deterministic and verifiable).  Returns (mu, logvar, z).
    """
    B, D_in = inputs.shape
    D_out = weight_bf16.shape[1]
    latent = D_out // 2
    tb = _pick_batch_block(B)

    mulogvar, z = pl.pallas_call(
        _recog_fused_z_kernel,
        out_shape=(
            jax.ShapeDtypeStruct((B, D_out), jnp.float32),
            jax.ShapeDtypeStruct((B, latent), jnp.float32),
        ),
        grid=(B // tb,),
        in_specs=[
            pl.BlockSpec((tb, D_in), lambda i: (i, 0)),
            pl.BlockSpec((D_in, D_out), lambda i: (0, 0)),
            pl.BlockSpec((1, D_out), lambda i: (0, 0)),
            pl.BlockSpec((tb, latent), lambda i: (i, 0)),   # eps, batch-tiled
        ],
        out_specs=(
            pl.BlockSpec((tb, D_out), lambda i: (i, 0)),
            pl.BlockSpec((tb, latent), lambda i: (i, 0)),   # z (64-wide; tiny)
        ),
        compiler_params=_compiler_params(tb, D_in, D_out, extra_lanes=latent),
    )(inputs, weight_bf16, bias2d, eps)

    return mulogvar[:, :latent], mulogvar[:, latent:], z


# --------------------------------------------------------------------------
# Self-test
# --------------------------------------------------------------------------
if __name__ == "__main__":
    key = jax.random.PRNGKey(0)
    k_x, k_w, k_b, k_eps = jax.random.split(key, 4)

    # Deterministic PyTorch-style Linear init: U(-1/sqrt(fan_in), +1/sqrt(fan_in)).
    fan_in = RECOG_INPUT_SIZE
    bound = 1.0 / jnp.sqrt(jnp.float32(fan_in))
    weight = jax.random.uniform(
        k_w, (RECOG_INPUT_SIZE, LATENT_SIZE * 2), jnp.float32, -bound, bound
    )
    bias = jax.random.uniform(k_b, (LATENT_SIZE * 2,), jnp.float32, -bound, bound)
    inputs = jax.random.normal(k_x, (BATCH, RECOG_INPUT_SIZE), jnp.float32)
    eps = jax.random.normal(k_eps, (BATCH, LATENT_SIZE), jnp.float32)

    # One-time parameter prep (bf16 weight, (1, D_out) bias).
    weight_bf16, bias2d = prepare_params(weight, bias)

    # ---- Module-semantics entry point ----
    mu, logvar = recognition_network(inputs, weight_bf16, bias2d)
    jax.block_until_ready((mu, logvar))

    assert mu.shape == (BATCH, LATENT_SIZE)
    assert logvar.shape == (BATCH, LATENT_SIZE)

    # Exact-path reference: same bf16 operands, f32 accumulation.
    ref_bf16 = (
        jnp.dot(
            inputs.astype(jnp.bfloat16),
            weight_bf16,
            preferred_element_type=jnp.float32,
        )
        + bias2d
    )
    assert jnp.allclose(mu, ref_bf16[:, :LATENT_SIZE], atol=1e-5, rtol=1e-5)
    assert jnp.allclose(logvar, ref_bf16[:, LATENT_SIZE:], atol=1e-5, rtol=1e-5)

    # Module-semantics reference (full f32 Linear): loose tolerance accounts for
    # the bf16 weight/activation cast.  For strict fidelity, keep weight f32 in
    # prepare_params and drop the in-kernel cast — compute is negligible here.
    ref_f32 = inputs @ weight + bias
    assert jnp.allclose(mu, ref_f32[:, :LATENT_SIZE], atol=2e-2, rtol=2e-2)
    assert jnp.allclose(logvar, ref_f32[:, LATENT_SIZE:], atol=2e-2, rtol=2e-2)

    # ---- Fused reparameterization variant ----
    mu2, logvar2, z = recognition_network_with_z(inputs, weight_bf16, bias2d, eps)
    jax.block_until_ready((mu2, logvar2, z))

    assert z.shape == (BATCH, LATENT_SIZE)
    assert jnp.allclose(mu2, mu, atol=1e-6, rtol=1e-6)
    assert jnp.allclose(logvar2, logvar, atol=1e-6, rtol=1e-6)
    z_ref = mu2 + eps * jnp.exp(0.5 * logvar2)
    assert jnp.allclose(z, z_ref, atol=2e-3, rtol=2e-3)

    print("KERNEL_OK")
</pallas_src>

<mosaic_0001>
module attributes {stable_mosaic.version = 11 : i64} {
  func.func @_recog_kernel(%arg0: i32, %arg1: memref<256x256xf32, #tpu.memory_space<vmem>>, %arg2: memref<256x128xbf16, #tpu.memory_space<vmem>>, %arg3: memref<1x128xf32, #tpu.memory_space<vmem>>, %arg4: memref<256x128xf32, #tpu.memory_space<vmem>>) attributes {dimension_semantics = [#tpu.dimension_semantics<parallel>], iteration_bounds = array<i64: 1>, scalar_prefetch = 0 : i64, scratch_operands = 0 : i64, tpu.core_type = #tpu.core_type<tc>, window_params = [{transform_indices = @transform_0, window_bounds = array<i64: 256, 256>}, {pipeline_mode = #tpu.pipeline_mode<synchronous>, transform_indices = @transform_1, window_bounds = array<i64: 256, 128>}, {pipeline_mode = #tpu.pipeline_mode<synchronous>, transform_indices = @transform_2, window_bounds = array<i64: 1, 128>}, {transform_indices = @transform_3, window_bounds = array<i64: 256, 128>}]} {
    %c0 = arith.constant 0 : index
    %c0_0 = arith.constant 0 : index
    %0 = vector.load %arg1[%c0, %c0_0] : memref<256x256xf32, #tpu.memory_space<vmem>>, vector<256x256xf32>
    %1 = arith.truncf %0 : vector<256x256xf32> to vector<256x256xbf16>
    %c0_1 = arith.constant 0 : index
    %c0_2 = arith.constant 0 : index
    %2 = vector.load %arg2[%c0_1, %c0_2] : memref<256x128xbf16, #tpu.memory_space<vmem>>, vector<256x128xbf16>
    %cst = arith.constant dense<0.000000e+00> : vector<256x128xf32>
    %3 = tpu.matmul %1, %2, %cst {dimension_numbers = #tpu.dot_dimension_numbers<[1], [0], [0], [1], [0, 0, 1, 1], [], []>} : vector<256x256xbf16>, vector<256x128xbf16>, vector<256x128xf32> -> vector<256x128xf32>
    %c0_3 = arith.constant 0 : index
    %c0_4 = arith.constant 0 : index
    %4 = vector.load %arg3[%c0_3, %c0_4] : memref<1x128xf32, #tpu.memory_space<vmem>>, vector<1x128xf32>
    %5 = vector.broadcast %4 : vector<1x128xf32> to vector<256x128xf32>
    %6 = arith.addf %3, %5 : vector<256x128xf32>
    %c0_5 = arith.constant 0 : index
    %c0_6 = arith.constant 0 : index
    %7 = vector.load %arg4[%c0_5, %c0_6] : memref<256x128xf32, #tpu.memory_space<vmem>>, vector<256x128xf32>
    tpu.vector_store %arg4[%c0_5, %c0_6], %6 {strides = array<i32>} : memref<256x128xf32, #tpu.memory_space<vmem>>, vector<256x128xf32>,
    return
  }
  func.func @transform_0(%arg0: i32) -> (i32, i32) {
    %c0_i32 = arith.constant 0 : i32
    %c0_i32_0 = arith.constant 0 : i32
    return %arg0, %c0_i32 : i32, i32
  }
  func.func @transform_1(%arg0: i32) -> (i32, i32) {
    %c0_i32 = arith.constant 0 : i32
    %c0_i32_0 = arith.constant 0 : i32
    %c0_i32_1 = arith.constant 0 : i32
    return %c0_i32, %c0_i32_0 : i32, i32
  }
  func.func @transform_2(%arg0: i32) -> (i32, i32) {
    %c0_i32 = arith.constant 0 : i32
    %c0_i32_0 = arith.constant 0 : i32
    %c0_i32_1 = arith.constant 0 : i32
    return %c0_i32, %c0_i32_0 : i32, i32
  }
  func.func @transform_3(%arg0: i32) -> (i32, i32) {
    %c0_i32 = arith.constant 0 : i32
    %c0_i32_0 = arith.constant 0 : i32
    return %arg0, %c0_i32 : i32, i32
  }
}

</mosaic_0001>

<llo_original>
// kernel: recognition_network.1
$region0: #{recognition_network.1}
  #allocation0 [shape = 'u32[]', space=smem, size = 0x4, offset = 0x4, fixed_abs, tag = 'smem constant byte address 0x4 - core index']
  #allocation1 [shape = 'u32[144,128]{1,0:T(1,128)}', space=vmem, size = 0x12000, scoped, tag = 'internal scratch']
  %s0 = inlined_call_operand.hbm [shape: f32[256,256], index: 0, kind: input, shape index: {}]
  %s1 = inlined_call_operand.hbm [shape: bf16[256,128], index: 1, kind: input, shape index: {}]
  %s2 = inlined_call_operand.vmem [shape: f32[1,128], index: 2, kind: input, shape index: {}]
  %s3 = inlined_call_operand.vmem [shape: f32[256,128], index: 3, kind: output, shape index: {}]
  %s4 = sld [smem:[#allocation0]]
  $region30: #{recognition_network.1} parent=0
    _
  %s6 = ssub.s32 1, %s4
  %s7 = scalar_select 0, %s6, %s4
  $region1: #{recognition_network.1} parent=0
    #allocation2 [shape = 'u8[262144]{0}', space=vmem, size = 0x40000, scoped, tag = 'input window, operand 0, single buffered']
    #allocation3 [shape = 's32[1]{0}', space=sflag, size = 0x4, scoped, tag = 'scoped memory for recognition_network.1']
    #allocation4 [shape = 'u8[65536]{0}', space=vmem, size = 0x10000, scoped, tag = 'input window, operand 1, single buffered']
    #allocation5 [shape = 's32[1]{0}', space=sflag, size = 0x4, scoped, tag = 'scoped memory for recognition_network.1']
    %8 = vsyncpa [#allocation3], 0
    %9 = vsyncpa [#allocation5], 0
    // Predicated region
    $region2: #{recognition_network.1} parent=1 // pred_check
      _
    $region3: #{recognition_network.1} parent=1 // pred_check_branch
      %11 = sbr.rel (0) target = $region5
    $region4: #{recognition_network.1} parent=1 // pred_region
      %s13 = ssub.s32 8192, 8192
      %14 = vsyncadd [#allocation3], %s13
      %s15 = sshll.u32 [#allocation2], 4
      %s16 = int_to_ptr.vmem [resolvable:$true] %s15
      %21 = dma.hbm_to_vmem [thread:$0]  %s0, 8192, %s16, [#allocation3], 256, 256, 16
    $region5: #{recognition_network.1} parent=1 // pred_fallthru
      _
    // Predicated region
    $region6: #{recognition_network.1} parent=1 // pred_check
      _
    $region7: #{recognition_network.1} parent=1 // pred_check_branch
      %23 = sbr.rel (0) target = $region9
    $region8: #{recognition_network.1} parent=1 // pred_region
      %s25 = ssub.s32 2048, 2048
      %26 = vsyncadd [#allocation5], %s25
      %s27 = sshll.u32 [#allocation4], 4
      %s28 = int_to_ptr.vmem [resolvable:$true] %s27
      %33 = dma.hbm_to_vmem [thread:$0]  %s1, 2048, %s28, [#allocation5], 64, 64, 4
    $region9: #{recognition_network.1} parent=1 // pred_fallthru
      _
    // Predicated region
    $region10: #{recognition_network.1} parent=1 // pred_check
      _
    $region11: #{recognition_network.1} parent=1 // pred_check_branch
      %35 = sbr.rel (0) target = $region13
    $region12: #{recognition_network.1} parent=1 // pred_region
      _
    $region13: #{recognition_network.1} parent=1 // pred_fallthru
      _
    // Predicated region
    $region14: #{recognition_network.1} parent=1 // pred_check
      _
    $region15: #{recognition_network.1} parent=1 // pred_check_branch
      %37 = sbr.rel (0) target = $region17
    $region16: #{recognition_network.1} parent=1 // pred_region
      %38 = dma.done [#allocation3], 8192
    $region17: #{recognition_network.1} parent=1 // pred_fallthru
      _
    // Predicated region
    $region18: #{recognition_network.1} parent=1 // pred_check
      _
    $region19: #{recognition_network.1} parent=1 // pred_check_branch
      %40 = sbr.rel (0) target = $region21
    $region20: #{recognition_network.1} parent=1 // pred_region
      %41 = dma.done [#allocation5], 2048
    $region21: #{recognition_network.1} parent=1 // pred_fallthru
      _
    %v43 = vld [vmem:[#allocation2] sm:$0xff]
    %v44 = vld [vmem:[#allocation2 + $0x8] sm:$0xff]
    %v45 = vld [vmem:[#allocation2 + $0x10] sm:$0xff]
    %v46 = vld [vmem:[#allocation2 + $0x18] sm:$0xff]
    %v47 = vld [vmem:[#allocation2 + $0x20] sm:$0xff]
    %v48 = vld [vmem:[#allocation2 + $0x28] sm:$0xff]
    %v49 = vld [vmem:[#allocation2 + $0x30] sm:$0xff]
    %v50 = vld [vmem:[#allocation2 + $0x38] sm:$0xff]
    %v51 = vld [vmem:[#allocation2 + $0x40] sm:$0xff]
    %v52 = vld [vmem:[#allocation2 + $0x48] sm:$0xff]
    %v53 = vld [vmem:[#allocation2 + $0x50] sm:$0xff]
    %v54 = vld [vmem:[#allocation2 + $0x58] sm:$0xff]
    %v55 = vld [vmem:[#allocation2 + $0x60] sm:$0xff]
    %v56 = vld [vmem:[#allocation2 + $0x68] sm:$0xff]
    %v57 = vld [vmem:[#allocation2 + $0x70] sm:$0xff]
    %v58 = vld [vmem:[#allocation2 + $0x78] sm:$0xff]
    %v59 = vld [vmem:[#allocation2 + $0x80] sm:$0xff]
    %v60 = vld [vmem:[#allocation2 + $0x88] sm:$0xff]
    %v61 = vld [vmem:[#allocation2 + $0x90] sm:$0xff]
    %v62 = vld [vmem:[#allocation2 + $0x98] sm:$0xff]
    %v63 = vld [vmem:[#allocation2 + $0xa0] sm:$0xff]
    %v64 = vld [vmem:[#allocation2 + $0xa8] sm:$0xff]
    %v65 = vld [vmem:[#allocation2 + $0xb0] sm:$0xff]
    %v66 = vld [vmem:[#allocation2 + $0xb8] sm:$0xff]
    %v67 = vld [vmem:[#allocation2 + $0xc0] sm:$0xff]
    %v68 = vld [vmem:[#allocation2 + $0xc8] sm:$0xff]
    %v69 = vld [vmem:[#allocation2 + $0xd0] sm:$0xff]
    %v70 = vld [vmem:[#allocation2 + $0xd8] sm:$0xff]
    %v71 = vld [vmem:[#allocation2 + $0xe0] sm:$0xff]
    %v72 = vld [vmem:[#allocation2 + $0xe8] sm:$0xff]
    %v73 = vld [vmem:[#allocation2 + $0xf0] sm:$0xff]
    %v74 = vld [vmem:[#allocation2 + $0xf8] sm:$0xff]
    %v75 = vld [vmem:[#allocation2 + $0x100] sm:$0xff]
    %v76 = vld [vmem:[#allocation2 + $0x108] sm:$0xff]
    %v77 = vld [vmem:[#allocation2 + $0x110] sm:$0xff]
    %v78 = vld [vmem:[#allocation2 + $0x118] sm:$0xff]
    %v79 = vld [vmem:[#allocation2 + $0x120] sm:$0xff]
    %v80 = vld [vmem:[#allocation2 + $0x128] sm:$0xff]
    %v81 = vld [vmem:[#allocation2 + $0x130] sm:$0xff]
    %v82 = vld [vmem:[#allocation2 + $0x138] sm:$0xff]
    %v83 = vld [vmem:[#allocation2 + $0x140] sm:$0xff]
    %v84 = vld [vmem:[#allocation2 + $0x148] sm:$0xff]
    %v85 = vld [vmem:[#allocation2 + $0x150] sm:$0xff]
    %v86 = vld [vmem:[#allocation2 + $0x158] sm:$0xff]
    %v87 = vld [vmem:[#allocation2 + $0x160] sm:$0xff]
    %v88 = vld [vmem:[#allocation2 + $0x168] sm:$0xff]
    %v89 = vld [vmem:[#allocation2 + $0x170] sm:$0xff]
    %v90 = vld [vmem:[#allocation2 + $0x178] sm:$0xff]
    %v91 = vld [vmem:[#allocation2 + $0x180] sm:$0xff]
    %v92 = vld [vmem:[#allocation2 + $0x188] sm:$0xff]
    %v93 = vld [vmem:[#allocation2 + $0x190] sm:$0xff]
    %v94 = vld [vmem:[#allocation2 + $0x198] sm:$0xff]
    %v95 = vld [vmem:[#allocation2 + $0x1a0] sm:$0xff]
    %v96 = vld [vmem:[#allocation2 + $0x1a8] sm:$0xff]
    %v97 = vld [vmem:[#allocation2 + $0x1b0] sm:$0xff]
    %v98 = vld [vmem:[#allocation2 + $0x1b8] sm:$0xff]
    %v99 = vld [vmem:[#allocation2 + $0x1c0] sm:$0xff]
    %v100 = vld [vmem:[#allocation2 + $0x1c8] sm:$0xff]
    %v101 = vld [vmem:[#allocation2 + $0x1d0] sm:$0xff]
    %v102 = vld [vmem:[#allocation2 + $0x1d8] sm:$0xff]
    %v103 = vld [vmem:[#allocation2 + $0x1e0] sm:$0xff]
    %v104 = vld [vmem:[#allocation2 + $0x1e8] sm:$0xff]
    %v105 = vld [vmem:[#allocation2 + $0x1f0] sm:$0xff]
    %v106 = vld [vmem:[#allocation2 + $0x1f8] sm:$0xff]
    %v107 = vpack.c.bf16 %v45, %v43
    %v108 = vpack.c.bf16 %v46, %v44
    %v109 = vpack.c.bf16 %v49, %v47
    %v110 = vpack.c.bf16 %v50, %v48
    %v111 = vpack.c.bf16 %v53, %v51
    %v112 = vpack.c.bf16 %v54, %v52
    %v113 = vpack.c.bf16 %v57, %v55
    %v114 = vpack.c.bf16 %v58, %v56
    %v115 = vpack.c.bf16 %v61, %v59
    %v116 = vpack.c.bf16 %v62, %v60
    %v117 = vpack.c.bf16 %v65, %v63
    %v118 = vpack.c.bf16 %v66, %v64
    %v119 = vpack.c.bf16 %v69, %v67
    %v120 = vpack.c.bf16 %v70, %v68
    %v121 = vpack.c.bf16 %v73, %v71
    %v122 = vpack.c.bf16 %v74, %v72
    %v123 = vpack.c.bf16 %v77, %v75
    %v124 = vpack.c.bf16 %v78, %v76
    %v125 = vpack.c.bf16 %v81, %v79
    %v126 = vpack.c.bf16 %v82, %v80
    %v127 = vpack.c.bf16 %v85, %v83
    %v128 = vpack.c.bf16 %v86, %v84
    %v129 = vpack.c.bf16 %v89, %v87
    %v130 = vpack.c.bf16 %v90, %v88
    %v131 = vpack.c.bf16 %v93, %v91
    %v132 = vpack.c.bf16 %v94, %v92
    %v133 = vpack.c.bf16 %v97, %v95
    %v134 = vpack.c.bf16 %v98, %v96
    %v135 = vpack.c.bf16 %v101, %v99
    %v136 = vpack.c.bf16 %v102, %v100
    %v137 = vpack.c.bf16 %v105, %v103
    %v138 = vpack.c.bf16 %v106, %v104
    %v139 = vld [vmem:[#allocation4] sm:$0xf]
    %v140 = vld [vmem:[#allocation4 + $0x4] sm:$0xf]
    %v141 = vld [vmem:[#allocation4 + $0x8] sm:$0xf]
    %v142 = vld [vmem:[#allocation4 + $0xc] sm:$0xf]
    %v143 = vld [vmem:[#allocation4 + $0x10] sm:$0xf]
    %v144 = vld [vmem:[#allocation4 + $0x14] sm:$0xf]
    %v145 = vld [vmem:[#allocation4 + $0x18] sm:$0xf]
    %v146 = vld [vmem:[#allocation4 + $0x1c] sm:$0xf]
    %v147 = vld [vmem:[#allocation4 + $0x20] sm:$0xf]
    %v148 = vld [vmem:[#allocation4 + $0x24] sm:$0xf]
    %v149 = vld [vmem:[#allocation4 + $0x28] sm:$0xf]
    %v150 = vld [vmem:[#allocation4 + $0x2c] sm:$0xf]
    %v151 = vld [vmem:[#allocation4 + $0x30] sm:$0xf]
    %v152 = vld [vmem:[#allocation4 + $0x34] sm:$0xf]
    %v153 = vld [vmem:[#allocation4 + $0x38] sm:$0xf]
    %v154 = vld [vmem:[#allocation4 + $0x3c] sm:$0xf]
    %v155 = vld [vmem:[#allocation4 + $0x40] sm:$0xf]
    %v156 = vld [vmem:[#allocation4 + $0x44] sm:$0xf]
    %v157 = vld [vmem:[#allocation4 + $0x48] sm:$0xf]
    %v158 = vld [vmem:[#allocation4 + $0x4c] sm:$0xf]
    %v159 = vld [vmem:[#allocation4 + $0x50] sm:$0xf]
    %v160 = vld [vmem:[#allocation4 + $0x54] sm:$0xf]
    %v161 = vld [vmem:[#allocation4 + $0x58] sm:$0xf]
    %v162 = vld [vmem:[#allocation4 + $0x5c] sm:$0xf]
    %v163 = vld [vmem:[#allocation4 + $0x60] sm:$0xf]
    %v164 = vld [vmem:[#allocation4 + $0x64] sm:$0xf]
    %v165 = vld [vmem:[#allocation4 + $0x68] sm:$0xf]
    %v166 = vld [vmem:[#allocation4 + $0x6c] sm:$0xf]
    %v167 = vld [vmem:[#allocation4 + $0x70] sm:$0xf]
    %v168 = vld [vmem:[#allocation4 + $0x74] sm:$0xf]
    %v169 = vld [vmem:[#allocation4 + $0x78] sm:$0xf]
    %v170 = vld [vmem:[#allocation4 + $0x7c] sm:$0xf]
    %v171 = vld [vmem:[%s2] sm:$0x1]
    %v173 = vlaneseq
    %v174 = vshrl.u32 %v173, 7
    %v175 = vsub.s32 0, %v174
    %v176 = vrot.slane %v171, %v175
    %v210 = vunpack.c.l.b16 %v139
    %v211 = vunpack.c.l.b16 %v140
    %v212 = vunpack.c.l.b16 %v141
    %v213 = vunpack.c.l.b16 %v142
    %v214 = vunpack.c.l.b16 %v143
    %v215 = vunpack.c.l.b16 %v144
    %v216 = vunpack.c.l.b16 %v145
    %v217 = vunpack.c.l.b16 %v146
    %v218 = vunpack.c.l.b16 %v147
    %v219 = vunpack.c.l.b16 %v148
    %v220 = vunpack.c.l.b16 %v149
    %v221 = vunpack.c.l.b16 %v150
    %v222 = vunpack.c.l.b16 %v151
    %v223 = vunpack.c.l.b16 %v152
    %v224 = vunpack.c.l.b16 %v153
    %v225 = vunpack.c.l.b16 %v154
    %v226 = vunpack.c.l.b16 %v155
    %v227 = vunpack.c.l.b16 %v156
    %v228 = vunpack.c.l.b16 %v157
    %v229 = vunpack.c.l.b16 %v158
    %v230 = vunpack.c.l.b16 %v159
    %v231 = vunpack.c.l.b16 %v160
    %v232 = vunpack.c.l.b16 %v161
    %v233 = vunpack.c.l.b16 %v162
    %v234 = vunpack.c.l.b16 %v163
    %v235 = vunpack.c.l.b16 %v164
    %v236 = vunpack.c.l.b16 %v165
    %v237 = vunpack.c.l.b16 %v166
    %v238 = vunpack.c.l.b16 %v167
    %v239 = vunpack.c.l.b16 %v168
    %v240 = vunpack.c.l.b16 %v169
    %v241 = vunpack.c.l.b16 %v170
    %v242 = vpack.c.b16 %v211, %v210
    %v243 = vpack.c.b16 %v213, %v212
    %v244 = vpack.c.b16 %v215, %v214
    %v245 = vpack.c.b16 %v217, %v216
    %v246 = vpack.c.b16 %v219, %v218
    %v247 = vpack.c.b16 %v221, %v220
    %v248 = vpack.c.b16 %v223, %v222
    %v249 = vpack.c.b16 %v225, %v224
    %v250 = vpack.c.b16 %v227, %v226
    %v251 = vpack.c.b16 %v229, %v228
    %v252 = vpack.c.b16 %v231, %v230
    %v253 = vpack.c.b16 %v233, %v232
    %v254 = vpack.c.b16 %v235, %v234
    %v255 = vpack.c.b16 %v237, %v236
    %v256 = vpack.c.b16 %v239, %v238
    %v257 = vpack.c.b16 %v241, %v240
    %274 = vmatprep.subr.bf16.mxu0 0
    %275 = vmatpush1.bf16.msra.mxu0 %v242
    %276 = vmatprep.subr.bf16.mxu0 0
    %277 = vmatpush1.bf16.msra.mxu0 %v243
    %278 = vmatprep.subr.bf16.mxu0 0
    %279 = vmatpush1.bf16.msra.mxu0 %v244
    %280 = vmatprep.subr.bf16.mxu0 0
    %281 = vmatpush1.bf16.msra.mxu0 %v245
    %282 = vmatprep.subr.bf16.mxu0 0
    %283 = vmatpush1.bf16.msra.mxu0 %v246
    %284 = vmatprep.subr.bf16.mxu0 0
    %285 = vmatpush1.bf16.msra.mxu0 %v247
    %286 = vmatprep.subr.bf16.mxu0 0
    %287 = vmatpush1.bf16.msra.mxu0 %v248
    %288 = vmatprep.subr.bf16.mxu0 0
    %289 = vmatpush1.bf16.msra.mxu0 %v249
    %290 = vmatprep.subr.bf16.mxu0 0
    %291 = vmatpush1.bf16.msra.mxu0 %v250
    %292 = vmatprep.subr.bf16.mxu0 0
    %293 = vmatpush1.bf16.msra.mxu0 %v251
    %294 = vmatprep.subr.bf16.mxu0 0
    %295 = vmatpush1.bf16.msra.mxu0 %v252
    %296 = vmatprep.subr.bf16.mxu0 0
    %297 = vmatpush1.bf16.msra.mxu0 %v253
    %298 = vmatprep.subr.bf16.mxu0 0
    %299 = vmatpush1.bf16.msra.mxu0 %v254
    %300 = vmatprep.subr.bf16.mxu0 0
    %301 = vmatpush1.bf16.msra.mxu0 %v255
    %302 = vmatprep.subr.bf16.mxu0 0
    %303 = vmatpush1.bf16.msra.mxu0 %v256
    %304 = vmatprep.subr.bf16.mxu0 0
    %305 = vmatpush1.bf16.msra.mxu0 %v257
    %306 = vmatprep.mubr.bf16.mxu0 %v108
    %307 = vmatmul.mubr.bf16.gmra.mrb[0].mxu0 %v107
    %v308 = vpop.f32.mrb[0].mxu0
    %v309 = vadd.f32 %v176, %v308
    %v310 = vpop.f32.mrb[0].mxu0
    %v311 = vpop.f32.mrb[0].mxu0
    %v312 = vadd.f32 %v176, %v311
    %v313 = vpop.f32.mrb[0].mxu0
    %314 = vmatprep.mubr.bf16.mxu0 %v110
    %315 = vmatmul.mubr.bf16.gmra.mrb[0].mxu0 %v109
    %v316 = vpop.f32.mrb[0].mxu0
    %v317 = vadd.f32 %v176, %v316
    %v318 = vpop.f32.mrb[0].mxu0
    %v319 = vpop.f32.mrb[0].mxu0
    %v320 = vadd.f32 %v176, %v319
    %v321 = vpop.f32.mrb[0].mxu0
    %322 = vmatprep.mubr.bf16.mxu0 %v112
    %323 = vmatmul.mubr.bf16.gmra.mrb[0].mxu0 %v111
    %v324 = vpop.f32.mrb[0].mxu0
    %v325 = vadd.f32 %v176, %v324
    %v326 = vpop.f32.mrb[0].mxu0
    %v327 = vpop.f32.mrb[0].mxu0
    %v328 = vadd.f32 %v176, %v327
    %v329 = vpop.f32.mrb[0].mxu0
    %330 = vmatprep.mubr.bf16.mxu0 %v114
    %331 = vmatmul.mubr.bf16.gmra.mrb[0].mxu0 %v113
    %v332 = vpop.f32.mrb[0].mxu0
    %v333 = vadd.f32 %v176, %v332
    %v334 = vpop.f32.mrb[0].mxu0
    %v335 = vpop.f32.mrb[0].mxu0
    %v336 = vadd.f32 %v176, %v335
    %v337 = vpop.f32.mrb[0].mxu0
    %338 = vmatprep.mubr.bf16.mxu0 %v116
    %339 = vmatmul.mubr.bf16.gmra.mrb[0].mxu0 %v115
    %v340 = vpop.f32.mrb[0].mxu0
    %v341 = vadd.f32 %v176, %v340
    %v342 = vpop.f32.mrb[0].mxu0
    %v343 = vpop.f32.mrb[0].mxu0
    %v344 = vadd.f32 %v176, %v343
    %v345 = vpop.f32.mrb[0].mxu0
    %346 = vmatprep.mubr.bf16.mxu0 %v118
    %347 = vmatmul.mubr.bf16.gmra.mrb[0].mxu0 %v117
    %v348 = vpop.f32.mrb[0].mxu0
    %v349 = vadd.f32 %v176, %v348
    %v350 = vpop.f32.mrb[0].mxu0
    %v351 = vpop.f32.mrb[0].mxu0
    %v352 = vadd.f32 %v176, %v351
    %v353 = vpop.f32.mrb[0].mxu0
    %354 = vmatprep.mubr.bf16.mxu0 %v120
    %355 = vmatmul.mubr.bf16.gmra.mrb[0].mxu0 %v119
    %v356 = vpop.f32.mrb[0].mxu0
    %v357 = vadd.f32 %v176, %v356
    %v358 = vpop.f32.mrb[0].mxu0
    %v359 = vpop.f32.mrb[0].mxu0
    %v360 = vadd.f32 %v176, %v359
    %v361 = vpop.f32.mrb[0].mxu0
    %362 = vmatprep.mubr.bf16.mxu0 %v122
    %363 = vmatmul.mubr.bf16.gmra.mrb[0].mxu0 %v121
    %v364 = vpop.f32.mrb[0].mxu0
    %v365 = vadd.f32 %v176, %v364
    %v366 = vpop.f32.mrb[0].mxu0
    %v367 = vpop.f32.mrb[0].mxu0
    %v368 = vadd.f32 %v176, %v367
    %v369 = vpop.f32.mrb[0].mxu0
    %370 = vmatprep.mubr.bf16.mxu0 %v124
    %371 = vmatmul.mubr.bf16.gmra.mrb[0].mxu0 %v123
    %v372 = vpop.f32.mrb[0].mxu0
    %v373 = vadd.f32 %v176, %v372
    %v374 = vpop.f32.mrb[0].mxu0
    %v375 = vpop.f32.mrb[0].mxu0
    %v376 = vadd.f32 %v176, %v375
    %v377 = vpop.f32.mrb[0].mxu0
    %378 = vmatprep.mubr.bf16.mxu0 %v126
    %379 = vmatmul.mubr.bf16.gmra.mrb[0].mxu0 %v125
    %v380 = vpop.f32.mrb[0].mxu0
    %v381 = vadd.f32 %v176, %v380
    %v382 = vpop.f32.mrb[0].mxu0
    %v383 = vpop.f32.mrb[0].mxu0
    %v384 = vadd.f32 %v176, %v383
    %v385 = vpop.f32.mrb[0].mxu0
    %386 = vmatprep.mubr.bf16.mxu0 %v128
    %387 = vmatmul.mubr.bf16.gmra.mrb[0].mxu0 %v127
    %v388 = vpop.f32.mrb[0].mxu0
    %v389 = vadd.f32 %v176, %v388
    %v390 = vpop.f32.mrb[0].mxu0
    %v391 = vpop.f32.mrb[0].mxu0
    %v392 = vadd.f32 %v176, %v391
    %v393 = vpop.f32.mrb[0].mxu0
    %394 = vmatprep.mubr.bf16.mxu0 %v130
    %395 = vmatmul.mubr.bf16.gmra.mrb[0].mxu0 %v129
    %v396 = vpop.f32.mrb[0].mxu0
    %v397 = vadd.f32 %v176, %v396
    %v398 = vpop.f32.mrb[0].mxu0
    %v399 = vpop.f32.mrb[0].mxu0
    %v400 = vadd.f32 %v176, %v399
    %v401 = vpop.f32.mrb[0].mxu0
    %402 = vmatprep.mubr.bf16.mxu0 %v132
    %403 = vmatmul.mubr.bf16.gmra.mrb[0].mxu0 %v131
    %v404 = vpop.f32.mrb[0].mxu0
    %v405 = vadd.f32 %v176, %v404
    %v406 = vpop.f32.mrb[0].mxu0
    %v407 = vpop.f32.mrb[0].mxu0
    %v408 = vadd.f32 %v176, %v407
    %v409 = vpop.f32.mrb[0].mxu0
    %410 = vmatprep.mubr.bf16.mxu0 %v134
    %411 = vmatmul.mubr.bf16.gmra.mrb[0].mxu0 %v133
    %v412 = vpop.f32.mrb[0].mxu0
    %v413 = vadd.f32 %v176, %v412
    %v414 = vpop.f32.mrb[0].mxu0
    %v415 = vpop.f32.mrb[0].mxu0
    %v416 = vadd.f32 %v176, %v415
    %v417 = vpop.f32.mrb[0].mxu0
    %418 = vmatprep.mubr.bf16.mxu0 %v136
    %419 = vmatmul.mubr.bf16.gmra.mrb[0].mxu0 %v135
    %v420 = vpop.f32.mrb[0].mxu0
    %v421 = vadd.f32 %v176, %v420
    %v422 = vpop.f32.mrb[0].mxu0
    %v423 = vpop.f32.mrb[0].mxu0
    %v424 = vadd.f32 %v176, %v423
    %v425 = vpop.f32.mrb[0].mxu0
    %426 = vmatprep.mubr.bf16.mxu0 %v138
    %427 = vmatmul.mubr.bf16.gmra.mrb[0].mxu0 %v137
    %v428 = vpop.f32.mrb[0].mxu0
    %v429 = vadd.f32 %v176, %v428
    %v430 = vpop.f32.mrb[0].mxu0
    %v431 = vpop.f32.mrb[0].mxu0
    %v432 = vadd.f32 %v176, %v431
    %v433 = vpop.f32.mrb[0].mxu0
    %434 = vdwg.mxu0
    %435 = vst [vmem:[%s3] sm:$0xff] %v309
    %436 = vst [vmem:[%s3 + $0x8] sm:$0xff] %v312
    %437 = vst [vmem:[%s3 + $0x10] sm:$0xff] %v317
    %438 = vst [vmem:[%s3 + $0x18] sm:$0xff] %v320
    %439 = vst [vmem:[%s3 + $0x20] sm:$0xff] %v325
    %440 = vst [vmem:[%s3 + $0x28] sm:$0xff] %v328
    %441 = vst [vmem:[%s3 + $0x30] sm:$0xff] %v333
    %442 = vst [vmem:[%s3 + $0x38] sm:$0xff] %v336
    %443 = vst [vmem:[%s3 + $0x40] sm:$0xff] %v341
    %444 = vst [vmem:[%s3 + $0x48] sm:$0xff] %v344
    %445 = vst [vmem:[%s3 + $0x50] sm:$0xff] %v349
    %446 = vst [vmem:[%s3 + $0x58] sm:$0xff] %v352
    %447 = vst [vmem:[%s3 + $0x60] sm:$0xff] %v357
    %448 = vst [vmem:[%s3 + $0x68] sm:$0xff] %v360
    %449 = vst [vmem:[%s3 + $0x70] sm:$0xff] %v365
    %450 = vst [vmem:[%s3 + $0x78] sm:$0xff] %v368
    %451 = vst [vmem:[%s3 + $0x80] sm:$0xff] %v373
    %452 = vst [vmem:[%s3 + $0x88] sm:$0xff] %v376
    %453 = vst [vmem:[%s3 + $0x90] sm:$0xff] %v381
    %454 = vst [vmem:[%s3 + $0x98] sm:$0xff] %v384
    %455 = vst [vmem:[%s3 + $0xa0] sm:$0xff] %v389
    %456 = vst [vmem:[%s3 + $0xa8] sm:$0xff] %v392
    %457 = vst [vmem:[%s3 + $0xb0] sm:$0xff] %v397
    %458 = vst [vmem:[%s3 + $0xb8] sm:$0xff] %v400
    %459 = vst [vmem:[%s3 + $0xc0] sm:$0xff] %v405
    %460 = vst [vmem:[%s3 + $0xc8] sm:$0xff] %v408
    %461 = vst [vmem:[%s3 + $0xd0] sm:$0xff] %v413
    %462 = vst [vmem:[%s3 + $0xd8] sm:$0xff] %v416
    %463 = vst [vmem:[%s3 + $0xe0] sm:$0xff] %v421
    %464 = vst [vmem:[%s3 + $0xe8] sm:$0xff] %v424
    %465 = vst [vmem:[%s3 + $0xf0] sm:$0xff] %v429
    %466 = vst [vmem:[%s3 + $0xf8] sm:$0xff] %v432
    // Predicated region
    $region22: #{recognition_network.1} parent=1 // pred_check
      _
    $region23: #{recognition_network.1} parent=1 // pred_check_branch
      %468 = sbr.rel (0) target = $region25
    $region24: #{recognition_network.1} parent=1 // pred_region
      _
    $region25: #{recognition_network.1} parent=1 // pred_fallthru
      _
    // Predicated region
    $region26: #{recognition_network.1} parent=1 // pred_check
      _
    $region27: #{recognition_network.1} parent=1 // pred_check_branch
      %470 = sbr.rel (0) target = $region29
    $region28: #{recognition_network.1} parent=1 // pred_region
      _
    $region29: #{recognition_network.1} parent=1 // pred_fallthru
      _
    %471 = vsyncpa [#allocation3], 1
    %472 = vsyncpa [#allocation5], 1

</llo_original>
